<compile_context>
chip_gen: v6e
topology: v6e:2x2x1
jax: 0.10.0
libtpu: 0.0.40
codegen_flags: <defaults>
</compile_context>

<pallas_src>
import jax
import jax.numpy as jnp
from jax.experimental import pallas as pl
from jax.experimental.pallas import tpu as pltpu


def _round_up(n, m):
    return (n + m - 1) // m * m


def _make_kernel(*, T, tT, K, pad, needs_mask, has_halo):
    def kernel(*refs):
        if has_halo:
            x_ref, halo_ref, w1_ref, b1_ref, w2_ref, b2_ref, o_ref = refs
        else:
            x_ref, w1_ref, b1_ref, w2_ref, b2_ref, o_ref = refs

        x_tile = x_ref[0]  # (tT, Cin_p)

        # Zero rows past the real sequence end (ragged last tile reads unspecified data,
        # and those rows double as the conv's right zero-padding).
        if needs_mask:
            i = pl.program_id(1)
            row = jax.lax.broadcasted_iota(jnp.int32, (tT, 1), 0) + i * tT
            x_tile = jnp.where(row < T, x_tile, jnp.zeros_like(x_tile))

        # Build the (tT + K - 1, Cin_p) input window: left halo | tile | right halo.
        if has_halo:
            halo = halo_ref[0, 0]  # (K-1, Cin_p), boundary rows already zeroed in wrapper
            pieces = []
            if pad > 0:
                pieces.append(halo[:pad])
            pieces.append(x_tile)
            if K - 1 - pad > 0:
                pieces.append(halo[pad:])
            window = jnp.concatenate(pieces, axis=0) if len(pieces) > 1 else pieces[0]
        else:
            window = x_tile

        # im2col: fold the K taps into the contraction dim -> one MXU matmul.
        if K > 1:
            cols = jnp.concatenate([window[k:k + tT] for k in range(K)], axis=1)
        else:
            cols = window

        acc = jnp.dot(cols, w1_ref[...], preferred_element_type=jnp.float32)
        acc = acc + b1_ref[...].astype(jnp.float32)
        h = jnp.maximum(acc, 0.0)  # ReLU in f32
        # TODO(synk): dropout is identity in eval mode; train-mode dropout (pltpu PRNG mask) not implemented.
        out = jnp.dot(h.astype(w2_ref.dtype), w2_ref[...],
                      preferred_element_type=jnp.float32)
        out = out + b2_ref[...].astype(jnp.float32)
        o_ref[0] = out.astype(o_ref.dtype)

    return kernel


def conv1d_linear(x, w1, b1, w2, b2, kernel_size, *, tile_t=256, compute_dtype=None):
    """Eval-mode Conv1dLinear forward.

    x: (B, T, Cin); w1: (H, Cin, K) conv weight; b1: (H,); w2: (Cin, H) linear weight; b2: (Cin,).
    Returns (B, T_out, Cin) with T_out = T + 2*((K-1)//2) - (K-1)  (== T for odd K, PyTorch-compatible).
    """
    B, T, Cin = x.shape
    H = w1.shape[0]
    K = int(kernel_size)
    pad = (K - 1) // 2
    T_out = T + 2 * pad - (K - 1)
    out_dtype = x.dtype
    cdt = compute_dtype if compute_dtype is not None else x.dtype

    # Lane-dense channel padding (multiple of 128) and sublane-friendly time tile (multiple of 8).
    Cin_p = _round_up(Cin, 128)
    H_p = _round_up(H, 128)
    tT = max(8, min(_round_up(tile_t, 8), _round_up(T_out, 8)))
    nT = pl.cdiv(T_out, tT)
    needs_mask = nT * tT > T
    has_halo = K > 1

    # Input: cast (bf16 path halves DMA bytes) and pad channels only if needed.
    xc = x.astype(cdt)
    if Cin_p != Cin:
        xc = jnp.pad(xc, ((0, 0), (0, 0), (0, Cin_p - Cin)))

    inputs = [xc]
    in_specs = [pl.BlockSpec((1, tT, Cin_p), lambda b, i: (b, i, 0))]

    if has_halo:
        # Per-tile halo rows (K-1 per tile): left `pad` rows before the tile, `K-1-pad` after.
        starts = jnp.arange(nT, dtype=jnp.int32) * tT
        if pad > 0:
            left = starts[:, None] - pad + jnp.arange(pad, dtype=jnp.int32)[None, :]
        else:
            left = jnp.zeros((nT, 0), jnp.int32)
        if K - 1 - pad > 0:
            right = starts[:, None] + tT + jnp.arange(K - 1 - pad, dtype=jnp.int32)[None, :]
        else:
            right = jnp.zeros((nT, 0), jnp.int32)
        halo_idx = jnp.concatenate([left, right], axis=1)                  # (nT, K-1)
        valid = (halo_idx >= 0) & (halo_idx < T)
        halo = jnp.take(xc, jnp.clip(halo_idx, 0, T - 1), axis=1)          # (B, nT, K-1, Cin_p)
        halo = jnp.where(valid[None, :, :, None], halo, 0).astype(cdt)
        inputs.append(halo)
        in_specs.append(pl.BlockSpec((1, 1, K - 1, Cin_p), lambda b, i: (b, i, 0, 0)))

    # Weights: conv taps folded into a (K*Cin_p, H_p) matrix; linear weight transposed; biases in f32.
    w1_p = jnp.zeros((H_p, Cin_p, K), cdt).at[:H, :Cin, :].set(w1.astype(cdt))
    w1_2d = jnp.transpose(w1_p, (2, 1, 0)).reshape(K * Cin_p, H_p)
    b1_p = jnp.zeros((1, H_p), jnp.float32).at[0, :H].set(b1.astype(jnp.float32))
    w2_p = jnp.zeros((H_p, Cin_p), cdt).at[:H, :Cin].set(jnp.transpose(w2).astype(cdt))
    b2_p = jnp.zeros((1, Cin_p), jnp.float32).at[0, :Cin].set(b2.astype(jnp.float32))

    inputs += [w1_2d, b1_p, w2_p, b2_p]
    in_specs += [
        pl.BlockSpec((K * Cin_p, H_p), lambda b, i: (0, 0)),
        pl.BlockSpec((1, H_p), lambda b, i: (0, 0)),
        pl.BlockSpec((H_p, Cin_p), lambda b, i: (0, 0)),
        pl.BlockSpec((1, Cin_p), lambda b, i: (0, 0)),
    ]

    kernel = _make_kernel(T=T, tT=tT, K=K, pad=pad,
                          needs_mask=needs_mask, has_halo=has_halo)

    out = pl.pallas_call(
        kernel,
        out_shape=jax.ShapeDtypeStruct((B, T_out, Cin_p), out_dtype),
        grid_spec=pltpu.PrefetchScalarGridSpec(
            num_scalar_prefetch=0,
            grid=(B, nT),
            in_specs=in_specs,
            out_specs=pl.BlockSpec((1, tT, Cin_p), lambda b, i: (b, i, 0)),
        ),
        compiler_params=pltpu.CompilerParams(
            dimension_semantics=("parallel", "parallel"),
            vmem_limit_bytes=32 * 1024 * 1024,
        ),
    )(*inputs)

    if Cin_p != Cin:
        out = out[..., :Cin]
    return out


def _reference(x, w1, b1, w2, b2, kernel_size):
    """Plain-JAX reference matching the PyTorch forward (eval mode)."""
    pad = (kernel_size - 1) // 2
    x_ncl = jnp.transpose(x, (0, 2, 1))
    y = jax.lax.conv_general_dilated(
        x_ncl, w1, window_strides=(1,), padding=[(pad, pad)],
        dimension_numbers=("NCH", "OIH", "NCH"))
    y = y + b1[None, :, None]
    y = jnp.maximum(y, 0.0)
    y = jnp.transpose(y, (0, 2, 1))
    return y @ w2.T + b2


if __name__ == "__main__":
    B, T, in_chans, hidden_chans, kernel_size = 2, 16, 8, 32, 3

    key = jax.random.PRNGKey(0)
    k_x, k_w1, k_b1, k_w2, k_b2 = jax.random.split(key, 5)

    x = jax.random.normal(k_x, (B, T, in_chans), dtype=jnp.float32)
    w1 = jax.random.normal(k_w1, (hidden_chans, in_chans, kernel_size), jnp.float32) * 0.1
    b1 = jax.random.normal(k_b1, (hidden_chans,), jnp.float32) * 0.1
    w2 = jax.random.normal(k_w2, (in_chans, hidden_chans), jnp.float32) * 0.1
    b2 = jax.random.normal(k_b2, (in_chans,), jnp.float32) * 0.1

    # 1) single T-tile, f32 path
    ref = _reference(x, w1, b1, w2, b2, kernel_size)
    out = jax.block_until_ready(conv1d_linear(x, w1, b1, w2, b2, kernel_size))
    assert out.shape == ref.shape
    assert jnp.allclose(out, ref, atol=1e-4, rtol=1e-4)

    # 2) multi-tile path: halo crossing tile boundaries + ragged last tile
    T2 = 40
    x2 = jax.random.normal(k_x, (B, T2, in_chans), dtype=jnp.float32)
    ref2 = _reference(x2, w1, b1, w2, b2, kernel_size)
    out2 = jax.block_until_ready(
        conv1d_linear(x2, w1, b1, w2, b2, kernel_size, tile_t=16))
    assert out2.shape == ref2.shape
    assert jnp.allclose(out2, ref2, atol=1e-4, rtol=1e-4)

    # 3) bf16 MXU-operand path (f32 accumulation), looser tolerance
    out_bf16 = jax.block_until_ready(
        conv1d_linear(x2, w1, b1, w2, b2, kernel_size, tile_t=16,
                      compute_dtype=jnp.bfloat16))
    assert jnp.allclose(out_bf16, ref2, atol=5e-2, rtol=5e-2)

    print("KERNEL_OK")
</pallas_src>

<mosaic_0001>
module attributes {stable_mosaic.version = 11 : i64} {
  func.func @kernel(%arg0: i32, %arg1: i32, %arg2: memref<1x16x128xf32, #tpu.memory_space<vmem>>, %arg3: memref<1x1x2x128xf32, #tpu.memory_space<vmem>>, %arg4: memref<384x128xf32, #tpu.memory_space<vmem>>, %arg5: memref<1x128xf32, #tpu.memory_space<vmem>>, %arg6: memref<128x128xf32, #tpu.memory_space<vmem>>, %arg7: memref<1x128xf32, #tpu.memory_space<vmem>>, %arg8: memref<1x16x128xf32, #tpu.memory_space<vmem>>) attributes {dimension_semantics = [#tpu.dimension_semantics<parallel>, #tpu.dimension_semantics<parallel>], iteration_bounds = array<i64: 2, 1>, scalar_prefetch = 0 : i64, scratch_operands = 0 : i64, tpu.core_type = #tpu.core_type<tc>, window_params = [{transform_indices = @transform_0, window_bounds = array<i64: 1, 16, 128>}, {transform_indices = @transform_1, window_bounds = array<i64: 1, 1, 2, 128>}, {pipeline_mode = #tpu.pipeline_mode<synchronous>, transform_indices = @transform_2, window_bounds = array<i64: 384, 128>}, {pipeline_mode = #tpu.pipeline_mode<synchronous>, transform_indices = @transform_3, window_bounds = array<i64: 1, 128>}, {pipeline_mode = #tpu.pipeline_mode<synchronous>, transform_indices = @transform_4, window_bounds = array<i64: 128, 128>}, {pipeline_mode = #tpu.pipeline_mode<synchronous>, transform_indices = @transform_5, window_bounds = array<i64: 1, 128>}, {transform_indices = @transform_6, window_bounds = array<i64: 1, 16, 128>}]} {
    %c0 = arith.constant 0 : index
    %c0_0 = arith.constant 0 : index
    %c0_1 = arith.constant 0 : index
    %0 = vector.load %arg2[%c0, %c0_0, %c0_1] : memref<1x16x128xf32, #tpu.memory_space<vmem>>, vector<1x16x128xf32>
    %1 = vector.shape_cast %0 : vector<1x16x128xf32> to vector<16x128xf32>
    %c0_2 = arith.constant 0 : index
    %c0_3 = arith.constant 0 : index
    %c0_4 = arith.constant 0 : index
    %c0_5 = arith.constant 0 : index
    %2 = vector.load %arg3[%c0_2, %c0_3, %c0_4, %c0_5] : memref<1x1x2x128xf32, #tpu.memory_space<vmem>>, vector<1x1x2x128xf32>
    %3 = vector.shape_cast %2 : vector<1x1x2x128xf32> to vector<2x128xf32>
    %4 = vector.extract_strided_slice %3 {offsets = [0, 0], sizes = [1, 128], strides = [1, 1]} : vector<2x128xf32> to vector<1x128xf32>
    %5 = vector.extract_strided_slice %3 {offsets = [1, 0], sizes = [1, 128], strides = [1, 1]} : vector<2x128xf32> to vector<1x128xf32>
    %6 = tpu.concatenate %4, %1, %5 in 0 : vector<1x128xf32>, vector<16x128xf32>, vector<1x128xf32> -> vector<18x128xf32>
    %7 = vector.extract_strided_slice %6 {offsets = [0, 0], sizes = [16, 128], strides = [1, 1]} : vector<18x128xf32> to vector<16x128xf32>
    %8 = vector.extract_strided_slice %6 {offsets = [1, 0], sizes = [16, 128], strides = [1, 1]} : vector<18x128xf32> to vector<16x128xf32>
    %9 = vector.extract_strided_slice %6 {offsets = [2, 0], sizes = [16, 128], strides = [1, 1]} : vector<18x128xf32> to vector<16x128xf32>
    %10 = tpu.concatenate %7, %8, %9 in 1 : vector<16x128xf32>, vector<16x128xf32>, vector<16x128xf32> -> vector<16x384xf32>
    %c0_6 = arith.constant 0 : index
    %c0_7 = arith.constant 0 : index
    %11 = vector.load %arg4[%c0_6, %c0_7] : memref<384x128xf32, #tpu.memory_space<vmem>>, vector<384x128xf32>
    %cst = arith.constant dense<0.000000e+00> : vector<16x128xf32>
    %12 = tpu.matmul %10, %11, %cst {dimension_numbers = #tpu.dot_dimension_numbers<[1], [0], [0], [1], [0, 0, 1, 1], [], []>} : vector<16x384xf32>, vector<384x128xf32>, vector<16x128xf32> -> vector<16x128xf32>
    %c0_8 = arith.constant 0 : index
    %c0_9 = arith.constant 0 : index
    %13 = vector.load %arg5[%c0_8, %c0_9] : memref<1x128xf32, #tpu.memory_space<vmem>>, vector<1x128xf32>
    %14 = vector.broadcast %13 : vector<1x128xf32> to vector<16x128xf32>
    %15 = arith.addf %12, %14 : vector<16x128xf32>
    %cst_10 = arith.constant 0.000000e+00 : f32
    %16 = vector.broadcast %cst_10 : f32 to vector<16x128xf32>
    %17 = arith.maximumf %15, %16 : vector<16x128xf32>
    %c0_11 = arith.constant 0 : index
    %c0_12 = arith.constant 0 : index
    %18 = vector.load %arg6[%c0_11, %c0_12] : memref<128x128xf32, #tpu.memory_space<vmem>>, vector<128x128xf32>
    %cst_13 = arith.constant dense<0.000000e+00> : vector<16x128xf32>
    %19 = tpu.matmul %17, %18, %cst_13 {dimension_numbers = #tpu.dot_dimension_numbers<[1], [0], [0], [1], [0, 0, 1, 1], [], []>} : vector<16x128xf32>, vector<128x128xf32>, vector<16x128xf32> -> vector<16x128xf32>
    %c0_14 = arith.constant 0 : index
    %c0_15 = arith.constant 0 : index
    %20 = vector.load %arg7[%c0_14, %c0_15] : memref<1x128xf32, #tpu.memory_space<vmem>>, vector<1x128xf32>
    %21 = vector.broadcast %20 : vector<1x128xf32> to vector<16x128xf32>
    %22 = arith.addf %19, %21 : vector<16x128xf32>
    %c0_16 = arith.constant 0 : index
    %c0_17 = arith.constant 0 : index
    %c0_18 = arith.constant 0 : index
    %23 = vector.load %arg8[%c0_16, %c0_17, %c0_18] : memref<1x16x128xf32, #tpu.memory_space<vmem>>, vector<1x16x128xf32>
    %24 = vector.shape_cast %23 : vector<1x16x128xf32> to vector<16x128xf32>
    %25 = vector.shape_cast %22 : vector<16x128xf32> to vector<1x16x128xf32>
    tpu.vector_store %arg8[%c0_16, %c0_17, %c0_18], %25 {strides = array<i32>} : memref<1x16x128xf32, #tpu.memory_space<vmem>>, vector<1x16x128xf32>,
    return
  }
  func.func @transform_0(%arg0: i32, %arg1: i32) -> (i32, i32, i32) {
    %c0_i32 = arith.constant 0 : i32
    %c0_i32_0 = arith.constant 0 : i32
    return %arg0, %arg1, %c0_i32 : i32, i32, i32
  }
  func.func @transform_1(%arg0: i32, %arg1: i32) -> (i32, i32, i32, i32) {
    %c0_i32 = arith.constant 0 : i32
    %c0_i32_0 = arith.constant 0 : i32
    %c0_i32_1 = arith.constant 0 : i32
    return %arg0, %arg1, %c0_i32, %c0_i32_0 : i32, i32, i32, i32
  }
  func.func @transform_2(%arg0: i32, %arg1: i32) -> (i32, i32) {
    %c0_i32 = arith.constant 0 : i32
    %c0_i32_0 = arith.constant 0 : i32
    %c0_i32_1 = arith.constant 0 : i32
    return %c0_i32, %c0_i32_0 : i32, i32
  }
  func.func @transform_3(%arg0: i32, %arg1: i32) -> (i32, i32) {
    %c0_i32 = arith.constant 0 : i32
    %c0_i32_0 = arith.constant 0 : i32
    %c0_i32_1 = arith.constant 0 : i32
    return %c0_i32, %c0_i32_0 : i32, i32
  }
  func.func @transform_4(%arg0: i32, %arg1: i32) -> (i32, i32) {
    %c0_i32 = arith.constant 0 : i32
    %c0_i32_0 = arith.constant 0 : i32
    %c0_i32_1 = arith.constant 0 : i32
    return %c0_i32, %c0_i32_0 : i32, i32
  }
  func.func @transform_5(%arg0: i32, %arg1: i32) -> (i32, i32) {
    %c0_i32 = arith.constant 0 : i32
    %c0_i32_0 = arith.constant 0 : i32
    %c0_i32_1 = arith.constant 0 : i32
    return %c0_i32, %c0_i32_0 : i32, i32
  }
  func.func @transform_6(%arg0: i32, %arg1: i32) -> (i32, i32, i32) {
    %c0_i32 = arith.constant 0 : i32
    %c0_i32_0 = arith.constant 0 : i32
    return %arg0, %arg1, %c0_i32 : i32, i32, i32
  }
}

</mosaic_0001>

<llo_original>
// kernel: tpu_custom_call.1
$region0: #{tpu_custom_call.1}
  #allocation0 [shape = 'u32[]', space=smem, size = 0x4, offset = 0x4, fixed_abs, tag = 'smem constant byte address 0x4 - core index']
  #allocation1 [shape = 'u32[144,128]{1,0:T(1,128)}', space=vmem, size = 0x12000, scoped, tag = 'internal scratch']
  %s0 = inlined_call_operand.hbm [shape: f32[2,16,128], index: 0, kind: input, shape index: {}]
  %s1 = inlined_call_operand.hbm [shape: f32[2,1,2,128], index: 1, kind: input, shape index: {}]
  %s2 = inlined_call_operand.hbm [shape: f32[384,128], index: 2, kind: input, shape index: {}]
  %s3 = inlined_call_operand.vmem [shape: f32[1,128], index: 3, kind: input, shape index: {}]
  %s4 = inlined_call_operand.hbm [shape: f32[128,128], index: 4, kind: input, shape index: {}]
  %s5 = inlined_call_operand.vmem [shape: f32[1,128], index: 5, kind: input, shape index: {}]
  %s6 = inlined_call_operand.hbm [shape: f32[2,16,128], index: 6, kind: output, shape index: {}]
  %s7 = sld [smem:[#allocation0]]
  $region73: #{tpu_custom_call.1} parent=0
    _
  %s9 = ssub.s32 1, %s7
  %s10 = scalar_select 0, %s9, %s7
  $region1: #{tpu_custom_call.1} parent=0
    #allocation2 [shape = 'u8[16384]{0}', space=vmem, size = 0x4000, scoped, tag = 'input window, operand 0']
    #allocation3 [shape = 's32[2]{0}', space=sflag, size = 0x8, scoped, tag = 'scoped memory for tpu_custom_call.1']
    #allocation4 [shape = 's32[2]{0}', space=sflag, size = 0x8, scoped, tag = 'scoped memory for tpu_custom_call.1']
    #allocation5 [shape = 'u8[2048]{0}', space=vmem, size = 0x800, scoped, tag = 'input window, operand 1']
    #allocation6 [shape = 's32[2]{0}', space=sflag, size = 0x8, scoped, tag = 'scoped memory for tpu_custom_call.1']
    #allocation7 [shape = 'u8[196608]{0}', space=vmem, size = 0x30000, scoped, tag = 'input window, operand 2, single buffered']
    #allocation8 [shape = 'u8[65536]{0}', space=vmem, size = 0x10000, scoped, tag = 'input window, operand 4, single buffered']
    #allocation9 [shape = 's32[1]{0}', space=sflag, size = 0x4, scoped, tag = 'scoped memory for tpu_custom_call.1']
    #allocation10 [shape = 'u8[16384]{0}', space=vmem, size = 0x4000, scoped, tag = 'output window, operand 0']
    %11 = vsyncpa [#allocation3], 0
    %s12 = scalar_lea.sflag [#allocation3], 1
    %13 = vsyncpa %s12, 0
    %14 = vsyncpa [#allocation6], 0
    %s15 = scalar_lea.sflag [#allocation6], 1
    %16 = vsyncpa %s15, 0
    %17 = vsyncpa [#allocation9], 0
    %18 = vsyncpa [#allocation4], 0
    %s19 = scalar_lea.sflag [#allocation4], 1
    %20 = vsyncpa %s19, 0
    loop: start=0, step=1, limit=4
    $region2: #{tpu_custom_call.1} parent=1 // loop_pre_header
      _
    $region3: #{tpu_custom_call.1} parent=1 // loop_header
      %s22 = sphi 0, %s26
      %p23 = scmp.ge.s32.totalorder %s22, 4
      %s29 = sphi 0, %s41
      %s30 = sphi 0, %s37
      %s31 = sphi 0, %s29
      %s32 = sphi 0, %s30
      %s33 = sphi 0, %s31
      %s34 = sphi 0, %s32
      %s46 = sphi 0, %s48
      %s49 = sphi 0, %s46
      %s50 = sphi 0, %s49
      %s66 = sphi 0, %s50
      %s74 = sphi 0, %s76
      %s77 = sphi 0, %s74
      %s78 = sphi 0, %s77
      %s94 = sphi 0, %s78
      %s98 = sphi 0, %s98
      %s100 = sphi 0, %s98
      %s101 = sphi 0, %s100
      %s115 = sphi 0, %s101
      %s119 = sphi 0, %s119
      %s121 = sphi 0, %s119
      %s122 = sphi 0, %s121
      %s136 = sphi 0, %s122
      %s140 = sphi 0, %s140
      %s142 = sphi 0, %s140
      %s143 = sphi 0, %s142
      %s157 = sphi 0, %s143
      %s161 = sphi 0, %s161
      %s163 = sphi 0, %s161
      %s164 = sphi 0, %s163
      %s178 = sphi 0, %s164
      %s186 = sphi 0, %s188
      %s189 = sphi 0, %s186
      %s190 = sphi 0, %s189
      %s206 = sphi 0, %s190
    $region4: #{tpu_custom_call.1} parent=1 // loop_header_branch
      %25 = sbr.rel (%p23) target = $region8
    $region5: #{tpu_custom_call.1} parent=1 // loop_body
      %s27 = ssub.s32 %s22, 1
      %s28 = ssub.s32 %s22, 2
      %s35 = sadd.s32 1, %s30
      %p36 = scmp.ge.s32.totalorder %s35, 1
      %s37 = scalar_select %p36, 0, %s35
      %s38 = sadd.s32 1, %s29
      %s39 = scalar_select %p36, %s38, %s29
      %p40 = scmp.ge.s32.totalorder %s39, 2
      %s41 = scalar_select %p40, 0, %s39
      %s42 = ssub.s32 %s29, %s41
      %s43 = ssub.s32 %s30, %s37
      %s44 = sor.u32 %s42, %s43
      %p45 = scmp.eq.s32.totalorder %s44, 0
      %s47 = sadd.s32 %s46, 1
      %s48 = scalar_select %p45, %s46, %s47
      %p51 = pneg %p45
      %p52 = scmp.eq.s32.totalorder %s22, 1
      %p53 = por %p51, %p52
      %p54 = scmp.ne.s32.totalorder %s46, %s49
      %p55 = scmp.eq.s32.totalorder %s22, 0
      %p56 = por %p54, %p55
      %p57 = scmp.ne.s32.totalorder %s46, %s49
      %p58 = scmp.eq.s32.totalorder %s27, 1
      %p59 = por %p57, %p58
      %p60 = scmp.ne.s32.totalorder %s49, %s50
      %p61 = scmp.eq.s32.totalorder %s27, 0
      %p62 = por %p60, %p61
      %p63 = scmp.ne.s32.totalorder %s49, %s50
      %p64 = scmp.eq.s32.totalorder %s28, 1
      %p65 = por %p63, %p64
      %p67 = scmp.ne.s32.totalorder %s50, %s66
      %p68 = scmp.eq.s32.totalorder %s28, 0
      %p69 = por %p67, %p68
      %s70 = ssub.s32 %s29, %s41
      %s71 = ssub.s32 %s30, %s37
      %s72 = sor.u32 %s70, %s71
      %p73 = scmp.eq.s32.totalorder %s72, 0
      %s75 = sadd.s32 %s74, 1
      %s76 = scalar_select %p73, %s74, %s75
      %p79 = pneg %p73
      %p80 = scmp.eq.s32.totalorder %s22, 1
      %p81 = por %p79, %p80
      %p82 = scmp.ne.s32.totalorder %s74, %s77
      %p83 = scmp.eq.s32.totalorder %s22, 0
      %p84 = por %p82, %p83
      %p85 = scmp.ne.s32.totalorder %s74, %s77
      %p86 = scmp.eq.s32.totalorder %s27, 1
      %p87 = por %p85, %p86
      %p88 = scmp.ne.s32.totalorder %s77, %s78
      %p89 = scmp.eq.s32.totalorder %s27, 0
      %p90 = por %p88, %p89
      %p91 = scmp.ne.s32.totalorder %s77, %s78
      %p92 = scmp.eq.s32.totalorder %s28, 1
      %p93 = por %p91, %p92
      %p95 = scmp.ne.s32.totalorder %s78, %s94
      %p96 = scmp.eq.s32.totalorder %s28, 0
      %p97 = por %p95, %p96
      %s99 = sadd.s32 %s98, 1
      %p102 = scmp.eq.s32.totalorder %s22, 1
      %p103 = scmp.ne.s32.totalorder %s98, %s100
      %p104 = scmp.eq.s32.totalorder %s22, 0
      %p105 = por %p103, %p104
      %p106 = scmp.ne.s32.totalorder %s98, %s100
      %p107 = scmp.eq.s32.totalorder %s27, 1
      %p108 = por %p106, %p107
      %p109 = scmp.ne.s32.totalorder %s100, %s101
      %p110 = scmp.eq.s32.totalorder %s27, 0
      %p111 = por %p109, %p110
      %p112 = scmp.ne.s32.totalorder %s100, %s101
      %p113 = scmp.eq.s32.totalorder %s28, 1
      %p114 = por %p112, %p113
      %p116 = scmp.ne.s32.totalorder %s101, %s115
      %p117 = scmp.eq.s32.totalorder %s28, 0
      %p118 = por %p116, %p117
      %s120 = sadd.s32 %s119, 1
      %p123 = scmp.eq.s32.totalorder %s22, 1
      %p124 = scmp.ne.s32.totalorder %s119, %s121
      %p125 = scmp.eq.s32.totalorder %s22, 0
      %p126 = por %p124, %p125
      %p127 = scmp.ne.s32.totalorder %s119, %s121
      %p128 = scmp.eq.s32.totalorder %s27, 1
      %p129 = por %p127, %p128
      %p130 = scmp.ne.s32.totalorder %s121, %s122
      %p131 = scmp.eq.s32.totalorder %s27, 0
      %p132 = por %p130, %p131
      %p133 = scmp.ne.s32.totalorder %s121, %s122
      %p134 = scmp.eq.s32.totalorder %s28, 1
      %p135 = por %p133, %p134
      %p137 = scmp.ne.s32.totalorder %s122, %s136
      %p138 = scmp.eq.s32.totalorder %s28, 0
      %p139 = por %p137, %p138
      %s141 = sadd.s32 %s140, 1
      %p144 = scmp.eq.s32.totalorder %s22, 1
      %p145 = scmp.ne.s32.totalorder %s140, %s142
      %p146 = scmp.eq.s32.totalorder %s22, 0
      %p147 = por %p145, %p146
      %p148 = scmp.ne.s32.totalorder %s140, %s142
      %p149 = scmp.eq.s32.totalorder %s27, 1
      %p150 = por %p148, %p149
      %p151 = scmp.ne.s32.totalorder %s142, %s143
      %p152 = scmp.eq.s32.totalorder %s27, 0
      %p153 = por %p151, %p152
      %p154 = scmp.ne.s32.totalorder %s142, %s143
      %p155 = scmp.eq.s32.totalorder %s28, 1
      %p156 = por %p154, %p155
      %p158 = scmp.ne.s32.totalorder %s143, %s157
      %p159 = scmp.eq.s32.totalorder %s28, 0
      %p160 = por %p158, %p159
      %s162 = sadd.s32 %s161, 1
      %p165 = scmp.eq.s32.totalorder %s22, 1
      %p166 = scmp.ne.s32.totalorder %s161, %s163
      %p167 = scmp.eq.s32.totalorder %s22, 0
      %p168 = por %p166, %p167
      %p169 = scmp.ne.s32.totalorder %s161, %s163
      %p170 = scmp.eq.s32.totalorder %s27, 1
      %p171 = por %p169, %p170
      %p172 = scmp.ne.s32.totalorder %s163, %s164
      %p173 = scmp.eq.s32.totalorder %s27, 0
      %p174 = por %p172, %p173
      %p175 = scmp.ne.s32.totalorder %s163, %s164
      %p176 = scmp.eq.s32.totalorder %s28, 1
      %p177 = por %p175, %p176
      %p179 = scmp.ne.s32.totalorder %s164, %s178
      %p180 = scmp.eq.s32.totalorder %s28, 0
      %p181 = por %p179, %p180
      %s182 = ssub.s32 %s29, %s41
      %s183 = ssub.s32 %s30, %s37
      %s184 = sor.u32 %s182, %s183
      %p185 = scmp.eq.s32.totalorder %s184, 0
      %s187 = sadd.s32 %s186, 1
      %s188 = scalar_select %p185, %s186, %s187
      %p191 = pneg %p185
      %p192 = scmp.eq.s32.totalorder %s22, 1
      %p193 = por %p191, %p192
      %p194 = scmp.ne.s32.totalorder %s186, %s189
      %p195 = scmp.eq.s32.totalorder %s22, 0
      %p196 = por %p194, %p195
      %p197 = scmp.ne.s32.totalorder %s186, %s189
      %p198 = scmp.eq.s32.totalorder %s27, 1
      %p199 = por %p197, %p198
      %p200 = scmp.ne.s32.totalorder %s189, %s190
      %p201 = scmp.eq.s32.totalorder %s27, 0
      %p202 = por %p200, %p201
      %p203 = scmp.ne.s32.totalorder %s189, %s190
      %p204 = scmp.eq.s32.totalorder %s28, 1
      %p205 = por %p203, %p204
      %p207 = scmp.ne.s32.totalorder %s190, %s206
      %p208 = scmp.eq.s32.totalorder %s28, 0
      %p209 = por %p207, %p208
      %p210 = scmp.le.s32.totalorder 1, %s22
      %p211 = scmp.lt.s32.totalorder %s22, 3
      %p212 = pnand %p210, %p211
      %p213 = pneg %p212
      // Predicated region
      $region9: #{tpu_custom_call.1} parent=5 // pred_check
        _
      $region10: #{tpu_custom_call.1} parent=5 // pred_check_branch
        %215 = sbr.rel (%p212) target = $region12
      $region11: #{tpu_custom_call.1} parent=5 // pred_region
        %s216 = ssub.s32 %s22, 1
        // Predicated region
        $region13: #{tpu_custom_call.1} parent=11 // pred_check
          %p217 = pneg %p111
        $region14: #{tpu_custom_call.1} parent=11 // pred_check_branch
          %219 = sbr.rel (%p217) target = $region16
        $region15: #{tpu_custom_call.1} parent=11 // pred_region
          %s221 = ssub.s32 6144, 6144
          %222 = vsyncadd [#allocation6], %s221
          %s223 = sshll.u32 [#allocation7], 4
          %s224 = int_to_ptr.vmem [resolvable:$true] %s223
          %229 = dma.hbm_to_vmem [thread:$0]  %s2, 6144, %s224, [#allocation6], 128, 128, 8
        $region16: #{tpu_custom_call.1} parent=11 // pred_fallthru
          _
        // Predicated region
        $region17: #{tpu_custom_call.1} parent=11 // pred_check
          %p230 = pneg %p132
        $region18: #{tpu_custom_call.1} parent=11 // pred_check_branch
          %232 = sbr.rel (%p230) target = $region20
        $region19: #{tpu_custom_call.1} parent=11 // pred_region
          _
        $region20: #{tpu_custom_call.1} parent=11 // pred_fallthru
          _
        // Predicated region
        $region21: #{tpu_custom_call.1} parent=11 // pred_check
          %p233 = pneg %p153
        $region22: #{tpu_custom_call.1} parent=11 // pred_check_branch
          %235 = sbr.rel (%p233) target = $region24
        $region23: #{tpu_custom_call.1} parent=11 // pred_region
          %s237 = ssub.s32 2048, 2048
          %238 = vsyncadd [#allocation9], %s237
          %s239 = sshll.u32 [#allocation8], 4
          %s240 = int_to_ptr.vmem [resolvable:$true] %s239
          %245 = dma.hbm_to_vmem [thread:$0]  %s4, 2048, %s240, [#allocation9], 128, 128, 8
        $region24: #{tpu_custom_call.1} parent=11 // pred_fallthru
          _
        // Predicated region
        $region25: #{tpu_custom_call.1} parent=11 // pred_check
          %p246 = pneg %p174
        $region26: #{tpu_custom_call.1} parent=11 // pred_check_branch
          %248 = sbr.rel (%p246) target = $region28
        $region27: #{tpu_custom_call.1} parent=11 // pred_region
          _
        $region28: #{tpu_custom_call.1} parent=11 // pred_fallthru
          _
      $region12: #{tpu_custom_call.1} parent=5 // pred_fallthru
        _
      %p249 = scmp.lt.s32.totalorder %s22, 2
      // Predicated region
      $region29: #{tpu_custom_call.1} parent=5 // pred_check
        %p250 = pneg %p249
      $region30: #{tpu_custom_call.1} parent=5 // pred_check_branch
        %252 = sbr.rel (%p250) target = $region32
      $region31: #{tpu_custom_call.1} parent=5 // pred_region
        // Predicated region
        $region33: #{tpu_custom_call.1} parent=31 // pred_check
          %p253 = pneg %p56
        $region34: #{tpu_custom_call.1} parent=31 // pred_check_branch
          %255 = sbr.rel (%p253) target = $region36
        $region35: #{tpu_custom_call.1} parent=31 // pred_region
          %s256 = sand.u32 %s46, 1
          %s257 = scalar_lea.sflag [#allocation3], %s256
          %s258 = sand.u32 %s46, 1
          %s259 = smul.addr %s258, 16
          %s260 = scalar_lea.vmem [#allocation2], %s259
          %s261 = smul.u32 2, %s30
          %s263 = ssub.s32 256, 256
          %264 = vsyncadd %s257, %s263
          %s265 = smul.addr %s29, 2
          %s266 = sadd.s32 %s261, %s265
          %s267 = smul.addr %s266, 128
          %s268 = scalar_lea.hbm %s0, %s267
          %s269 = sshll.u32 %s260, 4
          %s270 = int_to_ptr.vmem [resolvable:$true] %s269
          %275 = dma.hbm_to_vmem [thread:$0]  %s268, 256, %s270, %s257, 128, 128, 8
        $region36: #{tpu_custom_call.1} parent=31 // pred_fallthru
          _
        // Predicated region
        $region37: #{tpu_custom_call.1} parent=31 // pred_check
          %p276 = pneg %p84
        $region38: #{tpu_custom_call.1} parent=31 // pred_check_branch
          %278 = sbr.rel (%p276) target = $region40
        $region39: #{tpu_custom_call.1} parent=31 // pred_region
          %s279 = sand.u32 %s22, 1
          %s280 = scalar_lea.sflag [#allocation6], %s279
          %s281 = sand.u32 %s74, 1
          %s282 = smul.addr %s281, 2
          %s283 = scalar_lea.vmem [#allocation5], %s282
          %s285 = ssub.s32 32, 32
          %286 = vsyncadd %s280, %s285
          %s287 = sadd.s32 %s30, %s29
          %s288 = smul.addr %s287, 32
          %s289 = scalar_lea.hbm %s1, %s288
          %s291 = sshll.u32 %s283, 4
          %s292 = int_to_ptr.vmem [resolvable:$true] %s291
          %294 = dma.hbm_to_vmem [thread:$0]  %s289, 32, %s292, %s280
        $region40: #{tpu_custom_call.1} parent=31 // pred_fallthru
          _
      $region32: #{tpu_custom_call.1} parent=5 // pred_fallthru
        _
      %p295 = scmp.le.s32.totalorder 1, %s22
      %p296 = scmp.lt.s32.totalorder %s22, 3
      %p297 = pnand %p295, %p296
      %p298 = pneg %p297
      // Predicated region
      $region41: #{tpu_custom_call.1} parent=5 // pred_check
        _
      $region42: #{tpu_custom_call.1} parent=5 // pred_check_branch
        %300 = sbr.rel (%p297) target = $region44
      $region43: #{tpu_custom_call.1} parent=5 // pred_region
        %s301 = ssub.s32 %s22, 1
        %s302 = sand.u32 %s49, 1
        %s303 = scalar_lea.sflag [#allocation3], %s302
        %s304 = sand.u32 %s49, 1
        %s305 = smul.addr %s304, 16
        %s306 = scalar_lea.vmem [#allocation2], %s305
        // Predicated region
        $region45: #{tpu_custom_call.1} parent=43 // pred_check
          %p307 = pneg %p62
        $region46: #{tpu_custom_call.1} parent=43 // pred_check_branch
          %309 = sbr.rel (%p307) target = $region48
        $region47: #{tpu_custom_call.1} parent=43 // pred_region
          %310 = dma.done %s303, 256
        $region48: #{tpu_custom_call.1} parent=43 // pred_fallthru
          _
        %s311 = sand.u32 %s27, 1
        %s312 = scalar_lea.sflag [#allocation6], %s311
        %s313 = sand.u32 %s77, 1
        %s314 = smul.addr %s313, 2
        %s315 = scalar_lea.vmem [#allocation5], %s314
        // Predicated region
        $region49: #{tpu_custom_call.1} parent=43 // pred_check
          %p316 = pneg %p90
        $region50: #{tpu_custom_call.1} parent=43 // pred_check_branch
          %318 = sbr.rel (%p316) target = $region52
        $region51: #{tpu_custom_call.1} parent=43 // pred_region
          %319 = dma.done %s312, 32
        $region52: #{tpu_custom_call.1} parent=43 // pred_fallthru
          _
        // Predicated region
        $region53: #{tpu_custom_call.1} parent=43 // pred_check
          %p320 = pneg %p111
        $region54: #{tpu_custom_call.1} parent=43 // pred_check_branch
          %322 = sbr.rel (%p320) target = $region56
        $region55: #{tpu_custom_call.1} parent=43 // pred_region
          %323 = dma.done [#allocation6], 6144
        $region56: #{tpu_custom_call.1} parent=43 // pred_fallthru
          _
        // Predicated region
        $region57: #{tpu_custom_call.1} parent=43 // pred_check
          %p324 = pneg %p153
        $region58: #{tpu_custom_call.1} parent=43 // pred_check_branch
          %326 = sbr.rel (%p324) target = $region60
        $region59: #{tpu_custom_call.1} parent=43 // pred_region
          %327 = dma.done [#allocation9], 2048
        $region60: #{tpu_custom_call.1} parent=43 // pred_fallthru
          _
        %s328 = sand.u32 %s49, 1
        %s329 = scalar_lea.sflag [#allocation3], %s328
        %s330 = sand.u32 %s49, 1
        %s331 = smul.addr %s330, 16
        %s332 = scalar_lea.vmem [#allocation2], %s331
        %p333 = pneg %p62
        %p334 = pneg %p59
        %s335 = sand.u32 %s27, 1
        %s336 = scalar_lea.sflag [#allocation6], %s335
        %s337 = sand.u32 %s77, 1
        %s338 = smul.addr %s337, 2
        %s339 = scalar_lea.vmem [#allocation5], %s338
        %p340 = pneg %p90
        %p341 = pneg %p87
        %p342 = pneg %p111
        %p343 = pneg %p108
        %p344 = pneg %p132
        %p345 = pneg %p129
        %p346 = pneg %p153
        %p347 = pneg %p150
        %p348 = pneg %p174
        %p349 = pneg %p171
        %p350 = pneg %p202
        %p351 = pneg %p199
        %s352 = sand.u32 %s189, 1
        %s353 = scalar_lea.sflag [#allocation4], %s352
        %s354 = sand.u32 %s189, 1
        %s355 = smul.addr %s354, 16
        %s356 = scalar_lea.vmem [#allocation10], %s355
        %s357 = smul.u32 2, %s32
        %s358 = smul.u32 2, %s32
        %v359 = vld [vmem:[%s306] sm:$0xff]
        %v360 = vld [vmem:[%s306 + $0x8] sm:$0xff]
        %v361 = vld [vmem:[%s315] sm:$0x3]
        %vm364 = vcmask 1040384
        %v365 = vrot.slane %v359, 7
        %v366 = vrot.slane %v360, 7
        %v367 = vsel %vm364, %v365, %v366
        %v371 = vsel %vm364, %v361, %v365
        %v372 = vsel %vm364, %v366, %v361
        %vm375 = vcmask 1046528
        %v376 = vrot.slane %v371, 1
        %v377 = vrot.slane %v367, 1
        %v378 = vsel %vm375, %v376, %v377
        %v379 = vrot.slane %v372, 1
        %v380 = vsel %vm375, %v377, %v379
        %vm383 = vcmask 1045504
        %v384 = vrot.slane %v371, 2
        %v385 = vrot.slane %v367, 2
        %v386 = vsel %vm383, %v384, %v385
        %v387 = vrot.slane %v372, 2
        %v388 = vsel %vm383, %v385, %v387
        %v391 = vld [vmem:[#allocation7] sm:$0xff]
        %v392 = vld [vmem:[#allocation7 + $0x8] sm:$0xff]
        %v393 = vld [vmem:[#allocation7 + $0x10] sm:$0xff]
        %v394 = vld [vmem:[#allocation7 + $0x18] sm:$0xff]
        %v395 = vld [vmem:[#allocation7 + $0x20] sm:$0xff]
        %v396 = vld [vmem:[#allocation7 + $0x28] sm:$0xff]
        %v397 = vld [vmem:[#allocation7 + $0x30] sm:$0xff]
        %v398 = vld [vmem:[#allocation7 + $0x38] sm:$0xff]
        %v399 = vld [vmem:[#allocation7 + $0x40] sm:$0xff]
        %v400 = vld [vmem:[#allocation7 + $0x48] sm:$0xff]
        %v401 = vld [vmem:[#allocation7 + $0x50] sm:$0xff]
        %v402 = vld [vmem:[#allocation7 + $0x58] sm:$0xff]
        %v403 = vld [vmem:[#allocation7 + $0x60] sm:$0xff]
        %v404 = vld [vmem:[#allocation7 + $0x68] sm:$0xff]
        %v405 = vld [vmem:[#allocation7 + $0x70] sm:$0xff]
        %v406 = vld [vmem:[#allocation7 + $0x78] sm:$0xff]
        %v407 = vld [vmem:[#allocation7 + $0x80] sm:$0xff]
        %v408 = vld [vmem:[#allocation7 + $0x88] sm:$0xff]
        %v409 = vld [vmem:[#allocation7 + $0x90] sm:$0xff]
        %v410 = vld [vmem:[#allocation7 + $0x98] sm:$0xff]
        %v411 = vld [vmem:[#allocation7 + $0xa0] sm:$0xff]
        %v412 = vld [vmem:[#allocation7 + $0xa8] sm:$0xff]
        %v413 = vld [vmem:[#allocation7 + $0xb0] sm:$0xff]
        %v414 = vld [vmem:[#allocation7 + $0xb8] sm:$0xff]
        %v415 = vld [vmem:[#allocation7 + $0xc0] sm:$0xff]
        %v416 = vld [vmem:[#allocation7 + $0xc8] sm:$0xff]
        %v417 = vld [vmem:[#allocation7 + $0xd0] sm:$0xff]
        %v418 = vld [vmem:[#allocation7 + $0xd8] sm:$0xff]
        %v419 = vld [vmem:[#allocation7 + $0xe0] sm:$0xff]
        %v420 = vld [vmem:[#allocation7 + $0xe8] sm:$0xff]
        %v421 = vld [vmem:[#allocation7 + $0xf0] sm:$0xff]
        %v422 = vld [vmem:[#allocation7 + $0xf8] sm:$0xff]
        %v423 = vld [vmem:[#allocation7 + $0x100] sm:$0xff]
        %v424 = vld [vmem:[#allocation7 + $0x108] sm:$0xff]
        %v425 = vld [vmem:[#allocation7 + $0x110] sm:$0xff]
        %v426 = vld [vmem:[#allocation7 + $0x118] sm:$0xff]
        %v427 = vld [vmem:[#allocation7 + $0x120] sm:$0xff]
        %v428 = vld [vmem:[#allocation7 + $0x128] sm:$0xff]
        %v429 = vld [vmem:[#allocation7 + $0x130] sm:$0xff]
        %v430 = vld [vmem:[#allocation7 + $0x138] sm:$0xff]
        %v431 = vld [vmem:[#allocation7 + $0x140] sm:$0xff]
        %v432 = vld [vmem:[#allocation7 + $0x148] sm:$0xff]
        %v433 = vld [vmem:[#allocation7 + $0x150] sm:$0xff]
        %v434 = vld [vmem:[#allocation7 + $0x158] sm:$0xff]
        %v435 = vld [vmem:[#allocation7 + $0x160] sm:$0xff]
        %v436 = vld [vmem:[#allocation7 + $0x168] sm:$0xff]
        %v437 = vld [vmem:[#allocation7 + $0x170] sm:$0xff]
        %v438 = vld [vmem:[#allocation7 + $0x178] sm:$0xff]
        %v439 = vld [vmem:[%s3] sm:$0x1]
        %v441 = vlaneseq
        %v442 = vshrl.u32 %v441, 7
        %v443 = vsub.s32 0, %v442
        %v444 = vrot.slane %v439, %v443
        %446 = vmatprep.subr.mxu0 0.0
        %447 = vmatpush1.msra.mxu0 %v406
        %448 = vmatprep.subr.mxu0 0.0
        %449 = vmatpush1.msra.mxu0 %v405
        %450 = vmatprep.subr.mxu0 0.0
        %451 = vmatpush1.msra.mxu0 %v404
        %452 = vmatprep.subr.mxu0 0.0
        %453 = vmatpush1.msra.mxu0 %v403
        %454 = vmatprep.subr.mxu0 0.0
        %455 = vmatpush1.msra.mxu0 %v402
        %456 = vmatprep.subr.mxu0 0.0
        %457 = vmatpush1.msra.mxu0 %v401
        %458 = vmatprep.subr.mxu0 0.0
        %459 = vmatpush1.msra.mxu0 %v400
        %460 = vmatprep.subr.mxu0 0.0
        %461 = vmatpush1.msra.mxu0 %v399
        %462 = vmatprep.subr.mxu0 0.0
        %463 = vmatpush1.msra.mxu0 %v398
        %464 = vmatprep.subr.mxu0 0.0
        %465 = vmatpush1.msra.mxu0 %v397
        %466 = vmatprep.subr.mxu0 0.0
        %467 = vmatpush1.msra.mxu0 %v396
        %468 = vmatprep.subr.mxu0 0.0
        %469 = vmatpush1.msra.mxu0 %v395
        %470 = vmatprep.subr.mxu0 0.0
        %471 = vmatpush1.msra.mxu0 %v394
        %472 = vmatprep.subr.mxu0 0.0
        %473 = vmatpush1.msra.mxu0 %v393
        %474 = vmatprep.subr.mxu0 0.0
        %475 = vmatpush1.msra.mxu0 %v392
        %476 = vmatprep.subr.mxu0 0.0
        %477 = vmatpush1.msra.mxu0 %v391
        %478 = vmatprep.subr.mxu0 0.0
        %479 = vmatpush2.msra.mxu0 %v422
        %480 = vmatprep.subr.mxu0 0.0
        %481 = vmatpush2.msra.mxu0 %v421
        %482 = vmatprep.subr.mxu0 0.0
        %483 = vmatpush2.msra.mxu0 %v420
        %484 = vmatprep.subr.mxu0 0.0
        %485 = vmatpush2.msra.mxu0 %v419
        %486 = vmatprep.subr.mxu0 0.0
        %487 = vmatpush2.msra.mxu0 %v418
        %488 = vmatprep.subr.mxu0 0.0
        %489 = vmatpush2.msra.mxu0 %v417
        %490 = vmatprep.subr.mxu0 0.0
        %491 = vmatpush2.msra.mxu0 %v416
        %492 = vmatprep.subr.mxu0 0.0
        %493 = vmatpush2.msra.mxu0 %v415
        %494 = vmatprep.subr.mxu0 0.0
        %495 = vmatpush2.msra.mxu0 %v414
        %496 = vmatprep.subr.mxu0 0.0
        %497 = vmatpush2.msra.mxu0 %v413
        %498 = vmatprep.subr.mxu0 0.0
        %499 = vmatpush2.msra.mxu0 %v412
        %500 = vmatprep.subr.mxu0 0.0
        %501 = vmatpush2.msra.mxu0 %v411
        %502 = vmatprep.subr.mxu0 0.0
        %503 = vmatpush2.msra.mxu0 %v410
        %504 = vmatprep.subr.mxu0 0.0
        %505 = vmatpush2.msra.mxu0 %v409
        %506 = vmatprep.subr.mxu0 0.0
        %507 = vmatpush2.msra.mxu0 %v408
        %508 = vmatprep.subr.mxu0 0.0
        %509 = vmatpush2.msra.mxu0 %v407
        %510 = vmatprep.mubr.f32.mxu0 %v378
        %511 = vmatmul.mubr.f32.gmra.mxu0 %v371
        %v512 = vpop.f32.mrf.mxu0
        %v513 = vadd.f32 %v444, %v512
        %v514 = vpop.f32.mrf.mxu0
        %515 = vmatprep.mubr.f32.mxu0 %v380
        %516 = vmatmul.mubr.f32.gmra.mxu0 %v367
        %v517 = vpop.f32.mrf.mxu0
        %v518 = vadd.f32 %v444, %v517
        %v519 = vpop.f32.mrf.mxu0
        %520 = vdwg.mxu0
        %521 = vmatprep.subr.mxu0 0.0
        %522 = vmatpush1.msra.mxu0 %v438
        %523 = vmatprep.subr.mxu0 0.0
        %524 = vmatpush1.msra.mxu0 %v437
        %525 = vmatprep.subr.mxu0 0.0
        %526 = vmatpush1.msra.mxu0 %v436
        %527 = vmatprep.subr.mxu0 0.0
        %528 = vmatpush1.msra.mxu0 %v435
        %529 = vmatprep.subr.mxu0 0.0
        %530 = vmatpush1.msra.mxu0 %v434
        %531 = vmatprep.subr.mxu0 0.0
        %532 = vmatpush1.msra.mxu0 %v433
        %533 = vmatprep.subr.mxu0 0.0
        %534 = vmatpush1.msra.mxu0 %v432
        %535 = vmatprep.subr.mxu0 0.0
        %536 = vmatpush1.msra.mxu0 %v431
        %537 = vmatprep.subr.mxu0 0.0
        %538 = vmatpush1.msra.mxu0 %v430
        %539 = vmatprep.subr.mxu0 0.0
        %540 = vmatpush1.msra.mxu0 %v429
        %541 = vmatprep.subr.mxu0 0.0
        %542 = vmatpush1.msra.mxu0 %v428
        %543 = vmatprep.subr.mxu0 0.0
        %544 = vmatpush1.msra.mxu0 %v427
        %545 = vmatprep.subr.mxu0 0.0
        %546 = vmatpush1.msra.mxu0 %v426
        %547 = vmatprep.subr.mxu0 0.0
        %548 = vmatpush1.msra.mxu0 %v425
        %549 = vmatprep.subr.mxu0 0.0
        %550 = vmatpush1.msra.mxu0 %v424
        %551 = vmatprep.subr.mxu0 0.0
        %552 = vmatpush1.msra.mxu0 %v423
        %553 = vmatprep.subr.mxu0 0.0
        %554 = vmatpush2.msra.mxu0 0.0
        %555 = vmatprep.subr.mxu0 0.0
        %556 = vmatpush2.msra.mxu0 0.0
        %557 = vmatprep.subr.mxu0 0.0
        %558 = vmatpush2.msra.mxu0 0.0
        %559 = vmatprep.subr.mxu0 0.0
        %560 = vmatpush2.msra.mxu0 0.0
        %561 = vmatprep.subr.mxu0 0.0
        %562 = vmatpush2.msra.mxu0 0.0
        %563 = vmatprep.subr.mxu0 0.0
        %564 = vmatpush2.msra.mxu0 0.0
        %565 = vmatprep.subr.mxu0 0.0
        %566 = vmatpush2.msra.mxu0 0.0
        %567 = vmatprep.subr.mxu0 0.0
        %568 = vmatpush2.msra.mxu0 0.0
        %569 = vmatprep.subr.mxu0 0.0
        %570 = vmatpush2.msra.mxu0 0.0
        %571 = vmatprep.subr.mxu0 0.0
        %572 = vmatpush2.msra.mxu0 0.0
        %573 = vmatprep.subr.mxu0 0.0
        %574 = vmatpush2.msra.mxu0 0.0
        %575 = vmatprep.subr.mxu0 0.0
        %576 = vmatpush2.msra.mxu0 0.0
        %577 = vmatprep.subr.mxu0 0.0
        %578 = vmatpush2.msra.mxu0 0.0
        %579 = vmatprep.subr.mxu0 0.0
        %580 = vmatpush2.msra.mxu0 0.0
        %581 = vmatprep.subr.mxu0 0.0
        %582 = vmatpush2.msra.mxu0 0.0
        %583 = vmatprep.subr.mxu0 0.0
        %584 = vmatpush2.msra.mxu0 0.0
        %585 = vmatprep.mubr.f32.mxu0 0.0
        %586 = vmatmul.mubr.f32.gmra.mxu0 %v386
        %v587 = vpop.f32.mrf.mxu0
        %v588 = vadd.f32 %v513, %v587
        %v589 = vpop.f32.mrf.mxu0
        %590 = vmatprep.mubr.f32.mxu0 0.0
        %591 = vmatmul.mubr.f32.gmra.mxu0 %v388
        %v592 = vpop.f32.mrf.mxu0
        %v593 = vadd.f32 %v518, %v592
        %v594 = vpop.f32.mrf.mxu0
        %595 = vdwg.mxu0
        %v596 = vmax.f32 %v588, 0.0
        %v597 = vmax.f32 %v593, 0.0
        %v598 = vld [vmem:[#allocation8] sm:$0xff]
        %v599 = vld [vmem:[#allocation8 + $0x8] sm:$0xff]
        %v600 = vld [vmem:[#allocation8 + $0x10] sm:$0xff]
        %v601 = vld [vmem:[#allocation8 + $0x18] sm:$0xff]
        %v602 = vld [vmem:[#allocation8 + $0x20] sm:$0xff]
        %v603 = vld [vmem:[#allocation8 + $0x28] sm:$0xff]
        %v604 = vld [vmem:[#allocation8 + $0x30] sm:$0xff]
        %v605 = vld [vmem:[#allocation8 + $0x38] sm:$0xff]
        %v606 = vld [vmem:[#allocation8 + $0x40] sm:$0xff]
        %v607 = vld [vmem:[#allocation8 + $0x48] sm:$0xff]
        %v608 = vld [vmem:[#allocation8 + $0x50] sm:$0xff]
        %v609 = vld [vmem:[#allocation8 + $0x58] sm:$0xff]
        %v610 = vld [vmem:[#allocation8 + $0x60] sm:$0xff]
        %v611 = vld [vmem:[#allocation8 + $0x68] sm:$0xff]
        %v612 = vld [vmem:[#allocation8 + $0x70] sm:$0xff]
        %v613 = vld [vmem:[#allocation8 + $0x78] sm:$0xff]
        %v614 = vld [vmem:[%s5] sm:$0x1]
        %v616 = vlaneseq
        %v617 = vshrl.u32 %v616, 7
        %v618 = vsub.s32 0, %v617
        %v619 = vrot.slane %v614, %v618
        %621 = vmatprep.subr.mxu0 0.0
        %622 = vmatpush1.msra.mxu0 %v613
        %623 = vmatprep.subr.mxu0 0.0
        %624 = vmatpush1.msra.mxu0 %v612
        %625 = vmatprep.subr.mxu0 0.0
        %626 = vmatpush1.msra.mxu0 %v611
        %627 = vmatprep.subr.mxu0 0.0
        %628 = vmatpush1.msra.mxu0 %v610
        %629 = vmatprep.subr.mxu0 0.0
        %630 = vmatpush1.msra.mxu0 %v609
        %631 = vmatprep.subr.mxu0 0.0
        %632 = vmatpush1.msra.mxu0 %v608
        %633 = vmatprep.subr.mxu0 0.0
        %634 = vmatpush1.msra.mxu0 %v607
        %635 = vmatprep.subr.mxu0 0.0
        %636 = vmatpush1.msra.mxu0 %v606
        %637 = vmatprep.subr.mxu0 0.0
        %638 = vmatpush1.msra.mxu0 %v605
        %639 = vmatprep.subr.mxu0 0.0
        %640 = vmatpush1.msra.mxu0 %v604
        %641 = vmatprep.subr.mxu0 0.0
        %642 = vmatpush1.msra.mxu0 %v603
        %643 = vmatprep.subr.mxu0 0.0
        %644 = vmatpush1.msra.mxu0 %v602
        %645 = vmatprep.subr.mxu0 0.0
        %646 = vmatpush1.msra.mxu0 %v601
        %647 = vmatprep.subr.mxu0 0.0
        %648 = vmatpush1.msra.mxu0 %v600
        %649 = vmatprep.subr.mxu0 0.0
        %650 = vmatpush1.msra.mxu0 %v599
        %651 = vmatprep.subr.mxu0 0.0
        %652 = vmatpush1.msra.mxu0 %v598
        %653 = vmatprep.subr.mxu0 0.0
        %654 = vmatpush2.msra.mxu0 0.0
        %655 = vmatprep.subr.mxu0 0.0
        %656 = vmatpush2.msra.mxu0 0.0
        %657 = vmatprep.subr.mxu0 0.0
        %658 = vmatpush2.msra.mxu0 0.0
        %659 = vmatprep.subr.mxu0 0.0
        %660 = vmatpush2.msra.mxu0 0.0
        %661 = vmatprep.subr.mxu0 0.0
        %662 = vmatpush2.msra.mxu0 0.0
        %663 = vmatprep.subr.mxu0 0.0
        %664 = vmatpush2.msra.mxu0 0.0
        %665 = vmatprep.subr.mxu0 0.0
        %666 = vmatpush2.msra.mxu0 0.0
        %667 = vmatprep.subr.mxu0 0.0
        %668 = vmatpush2.msra.mxu0 0.0
        %669 = vmatprep.subr.mxu0 0.0
        %670 = vmatpush2.msra.mxu0 0.0
        %671 = vmatprep.subr.mxu0 0.0
        %672 = vmatpush2.msra.mxu0 0.0
        %673 = vmatprep.subr.mxu0 0.0
        %674 = vmatpush2.msra.mxu0 0.0
        %675 = vmatprep.subr.mxu0 0.0
        %676 = vmatpush2.msra.mxu0 0.0
        %677 = vmatprep.subr.mxu0 0.0
        %678 = vmatpush2.msra.mxu0 0.0
        %679 = vmatprep.subr.mxu0 0.0
        %680 = vmatpush2.msra.mxu0 0.0
        %681 = vmatprep.subr.mxu0 0.0
        %682 = vmatpush2.msra.mxu0 0.0
        %683 = vmatprep.subr.mxu0 0.0
        %684 = vmatpush2.msra.mxu0 0.0
        %685 = vmatprep.mubr.f32.mxu0 0.0
        %686 = vmatmul.mubr.f32.gmra.mxu0 %v596
        %v687 = vpop.f32.mrf.mxu0
        %v688 = vadd.f32 %v619, %v687
        %v689 = vpop.f32.mrf.mxu0
        %690 = vmatprep.mubr.f32.mxu0 0.0
        %691 = vmatmul.mubr.f32.gmra.mxu0 %v597
        %v692 = vpop.f32.mrf.mxu0
        %v693 = vadd.f32 %v619, %v692
        %v694 = vpop.f32.mrf.mxu0
        %695 = vdwg.mxu0
        %696 = vst [vmem:[%s356] sm:$0xff] %v688
        %697 = vst [vmem:[%s356 + $0x8] sm:$0xff] %v693
        %s698 = sand.u32 %s189, 1
        %s699 = scalar_lea.sflag [#allocation4], %s698
        %s700 = sand.u32 %s189, 1
        %s701 = smul.addr %s700, 16
        %s702 = scalar_lea.vmem [#allocation10], %s701
        // Predicated region
        $region61: #{tpu_custom_call.1} parent=43 // pred_check
          %p703 = pneg %p199
        $region62: #{tpu_custom_call.1} parent=43 // pred_check_branch
          %705 = sbr.rel (%p703) target = $region64
        $region63: #{tpu_custom_call.1} parent=43 // pred_region
          %s706 = smul.u32 2, %s32
          %s708 = ssub.s32 256, 256
          %709 = vsyncadd %s699, %s708
          %s710 = smul.addr %s31, 2
          %s711 = sadd.s32 %s706, %s710
          %s712 = smul.addr %s711, 128
          %s713 = scalar_lea.hbm %s6, %s712
          %s714 = sshll.u32 %s702, 4
          %s715 = int_to_ptr.vmem [resolvable:$true] %s714
          %720 = dma.vmem_to_hbm [thread:$0]  %s715, 256, %s713, %s699, 128, 128, 8
        $region64: #{tpu_custom_call.1} parent=43 // pred_fallthru
          _
      $region44: #{tpu_custom_call.1} parent=5 // pred_fallthru
        _
      %p721 = scmp.le.s32.totalorder 2, %s22
      // Predicated region
      $region65: #{tpu_custom_call.1} parent=5 // pred_check
        %p722 = pneg %p721
      $region66: #{tpu_custom_call.1} parent=5 // pred_check_branch
        %724 = sbr.rel (%p722) target = $region68
      $region67: #{tpu_custom_call.1} parent=5 // pred_region
        %s725 = ssub.s32 %s22, 2
        // Predicated region
        $region69: #{tpu_custom_call.1} parent=67 // pred_check
          %p726 = pneg %p205
        $region70: #{tpu_custom_call.1} parent=67 // pred_check_branch
          %728 = sbr.rel (%p726) target = $region72
        $region71: #{tpu_custom_call.1} parent=67 // pred_region
          %s729 = sand.u32 %s190, 1
          %s730 = scalar_lea.sflag [#allocation4], %s729
          %s731 = sand.u32 %s190, 1
          %s732 = smul.addr %s731, 16
          %s733 = scalar_lea.vmem [#allocation10], %s732
          %734 = dma.done %s730, 256
        $region72: #{tpu_custom_call.1} parent=67 // pred_fallthru
          _
      $region68: #{tpu_custom_call.1} parent=5 // pred_fallthru
        _
    $region6: #{tpu_custom_call.1} parent=1 // loop_footer
      %s26 = sadd.s32 1, %s22
    $region7: #{tpu_custom_call.1} parent=1 // loop_footer_branch
      %21 = sbr.rel target = $region3
    $region8: #{tpu_custom_call.1} parent=1 // loop_exit
      _
    %735 = vsyncpa [#allocation3], 1
    %s736 = scalar_lea.sflag [#allocation3], 1
    %737 = vsyncpa %s736, 1
    %738 = vsyncpa [#allocation6], 1
    %s739 = scalar_lea.sflag [#allocation6], 1
    %740 = vsyncpa %s739, 1
    %741 = vsyncpa [#allocation9], 1
    %742 = vsyncpa [#allocation4], 1
    %s743 = scalar_lea.sflag [#allocation4], 1
    %744 = vsyncpa %s743, 1

</llo_original>
